<compile_context>
chip_gen: v7x
topology: tpu7x:2x2x1
jax: 0.10.0
libtpu: 0.0.40
codegen_flags: <defaults>
</compile_context>

<pallas_src>
import functools

import jax
import jax.numpy as jnp
from jax.experimental import pallas as pl
from jax.experimental.pallas import tpu as pltpu

_LANE = 128


def _sigmoid_kernel(x_ref, o_ref, *, exact_div: bool):
    # Compute in f32 regardless of input dtype (v5e has no bf16 VPU/EUP paths
    # and this matches torch's 1/(1+exp(-x))), cast back to I/O dtype on store.
    x = x_ref[...].astype(jnp.float32)
    denom = 1.0 + jnp.exp(-x)          # exp on the EUP
    if exact_div:
        y = 1.0 / denom                # exact divide: bit-faithful at f32 output
    else:
        # EUP vrcp: ~2^-12 error, swallowed by the cast to bf16/fp16/int8.
        y = pl.reciprocal(denom, approx=True)
    o_ref[...] = y.astype(o_ref.dtype)


def _assume_two_tensorcores() -> bool:
    """Best-effort generation hint: v7x has 64 MiB VMEM/TC (2 TCs/chip),
    v5e/v6e have 128 MiB (1 TC). Defaults to True (the 2-MiB block floor keeps
    single-TC chips at roofline even if we guess wrong)."""
    try:
        info = pltpu.get_tpu_info()
        vmem = getattr(info, "vmem_capacity_bytes", None)
        if vmem is not None:
            return int(vmem) <= (96 << 20)
    except Exception:
        pass
    return True


def sigmoid_pallas(x: jax.Array, *, target_block_bytes: int = 4 * 1024 * 1024) -> jax.Array:
    """Elementwise sigmoid, matching torch: 1.0 / (1.0 + exp(-x))."""
    orig_shape = x.shape
    orig_dtype = x.dtype
    n = x.size
    if n == 0:
        return x

    itemsize = jnp.dtype(orig_dtype).itemsize
    # Native sublane tile height: 8 for 4-byte, 16 for 2-byte, 32 for 1-byte.
    sublane = 8 * max(1, 4 // itemsize)
    row_bytes = _LANE * itemsize

    # Flatten to a lane-dense (rows, 128) slab.  No wrapper-side pad/slice
    # round trip unless n % 128 != 0 (rare; tail pad is < 128 elements).
    x_flat = jnp.ravel(x)
    pad = (-n) % _LANE
    if pad:
        x_flat = jnp.pad(x_flat, (0, pad))
    rows = x_flat.size // _LANE
    x2d = x_flat.reshape(rows, _LANE)

    # Block rows: ~target_block_bytes per buffer, multiple of the native
    # sublane tile, capped at the actual row count (then it equals the full
    # dim, which Pallas also accepts).
    tile_rows = max(sublane, (target_block_bytes // row_bytes) // sublane * sublane)
    tile_rows = min(tile_rows, rows)

    # Megacore: on 2-TC chips make sure each core gets >= 4 blocks so the
    # per-core pipeline can overlap DMA with compute; never shrink blocks
    # below ~2 MiB (measured roofline cliff).  1-TC chips: never shrink.
    if _assume_two_tensorcores():
        want_steps = 8
        min_tile_rows = max(sublane, ((2 << 20) // row_bytes) // sublane * sublane)
        if pl.cdiv(rows, tile_rows) < want_steps and rows >= want_steps * min_tile_rows:
            shrunk = max(min_tile_rows, (pl.cdiv(rows, want_steps) // sublane) * sublane)
            tile_rows = min(tile_rows, shrunk)

    grid = (pl.cdiv(rows, tile_rows),)

    exact_div = itemsize >= 4
    kernel = functools.partial(_sigmoid_kernel, exact_div=exact_div)

    out2d = pl.pallas_call(
        kernel,
        out_shape=jax.ShapeDtypeStruct((rows, _LANE), orig_dtype),
        grid_spec=pltpu.PrefetchScalarGridSpec(
            num_scalar_prefetch=0,
            grid=grid,
            in_specs=[pl.BlockSpec((tile_rows, _LANE), lambda i: (i, 0))],
            out_specs=pl.BlockSpec((tile_rows, _LANE), lambda i: (i, 0)),
        ),
        compiler_params=pltpu.CompilerParams(
            dimension_semantics=("parallel",),
            vmem_limit_bytes=32 * 1024 * 1024,
        ),
        cost_estimate=pl.CostEstimate(
            flops=3 * n,
            transcendentals=n,
            bytes_accessed=2 * n * itemsize,
        ),
    )(x2d)

    if pad:
        return out2d.reshape(-1)[:n].reshape(orig_shape)
    return out2d.reshape(orig_shape)


if __name__ == "__main__":
    key = jax.random.PRNGKey(0)
    # Small NCHW-style activation tensor (works on any shape).
    x = jax.random.normal(key, (2, 4, 16, 16), dtype=jnp.float32)
    y = jax.block_until_ready(sigmoid_pallas(x))
    y_ref = 1.0 / (1.0 + jnp.exp(-x))
    assert y.shape == x.shape and y.dtype == x.dtype
    assert jnp.allclose(y, y_ref, atol=1e-6, rtol=1e-6)

    # Non-128-divisible element count exercises the (rare) pad fallback.
    x2 = jax.random.normal(jax.random.PRNGKey(1), (3, 5, 7), dtype=jnp.float32)
    y2 = jax.block_until_ready(sigmoid_pallas(x2))
    assert jnp.allclose(y2, 1.0 / (1.0 + jnp.exp(-x2)), atol=1e-6, rtol=1e-6)

    # bf16 path: f32 compute + EUP approx reciprocal, cast back on store.
    x3 = jax.random.normal(jax.random.PRNGKey(2), (4, 8, 128), dtype=jnp.bfloat16)
    y3 = jax.block_until_ready(sigmoid_pallas(x3))
    y3_ref = (1.0 / (1.0 + jnp.exp(-x3.astype(jnp.float32)))).astype(jnp.bfloat16)
    assert y3.shape == x3.shape and y3.dtype == x3.dtype
    assert jnp.allclose(
        y3.astype(jnp.float32), y3_ref.astype(jnp.float32), atol=1e-2, rtol=1e-2
    )

    # Ragged last row-block (no wrapper pad/slice): 100 rows with 8-row tiles.
    x4 = jax.random.normal(jax.random.PRNGKey(3), (100, 128), dtype=jnp.float32)
    y4 = jax.block_until_ready(sigmoid_pallas(x4, target_block_bytes=8 * 128 * 4))
    assert jnp.allclose(y4, 1.0 / (1.0 + jnp.exp(-x4)), atol=1e-6, rtol=1e-6)

    print("KERNEL_OK")
</pallas_src>

<mosaic_0001>
module attributes {stable_mosaic.version = 11 : i64} {
  func.func @_sigmoid_kernel(%arg0: i32, %arg1: memref<16x128xf32, #tpu.memory_space<vmem>>, %arg2: memref<16x128xf32, #tpu.memory_space<vmem>>) attributes {dimension_semantics = [#tpu.dimension_semantics<parallel>], iteration_bounds = array<i64: 1>, scalar_prefetch = 0 : i64, scratch_operands = 0 : i64, tpu.core_type = #tpu.core_type<tc>, window_params = [{transform_indices = @transform_0, window_bounds = array<i64: 16, 128>}, {transform_indices = @transform_1, window_bounds = array<i64: 16, 128>}]} {
    %c0 = arith.constant 0 : index
    %c0_0 = arith.constant 0 : index
    %0 = vector.load %arg1[%c0, %c0_0] : memref<16x128xf32, #tpu.memory_space<vmem>>, vector<16x128xf32>
    %cst = arith.constant 0.000000e+00 : f32
    %1 = vector.broadcast %cst : f32 to vector<16x128xf32>
    %2 = arith.subf %1, %0 : vector<16x128xf32>
    %3 = math.exp %2 : vector<16x128xf32>
    %cst_1 = arith.constant 1.000000e+00 : f32
    %4 = vector.broadcast %cst_1 : f32 to vector<16x128xf32>
    %5 = arith.addf %4, %3 : vector<16x128xf32>
    %cst_2 = arith.constant 1.000000e+00 : f32
    %6 = vector.broadcast %cst_2 : f32 to vector<16x128xf32>
    %7 = arith.divf %6, %5 : vector<16x128xf32>
    %c0_3 = arith.constant 0 : index
    %c0_4 = arith.constant 0 : index
    %8 = vector.load %arg2[%c0_3, %c0_4] : memref<16x128xf32, #tpu.memory_space<vmem>>, vector<16x128xf32>
    tpu.vector_store %arg2[%c0_3, %c0_4], %7 {strides = array<i32>} : memref<16x128xf32, #tpu.memory_space<vmem>>, vector<16x128xf32>,
    return
  }
  func.func @transform_0(%arg0: i32) -> (i32, i32) {
    %c0_i32 = arith.constant 0 : i32
    %c0_i32_0 = arith.constant 0 : i32
    return %arg0, %c0_i32 : i32, i32
  }
  func.func @transform_1(%arg0: i32) -> (i32, i32) {
    %c0_i32 = arith.constant 0 : i32
    %c0_i32_0 = arith.constant 0 : i32
    return %arg0, %c0_i32 : i32, i32
  }
}

</mosaic_0001>

<llo_original>
// kernel: tpu_custom_call.1
$region0: #{tpu_custom_call.1}
  #allocation0 [shape = 'u32[]', space=smem, size = 0x4, offset = 0x4, fixed_abs, tag = 'smem constant byte address 0x4 - core index']
  #allocation1 [shape = 'u32[144,128]{1,0:T(1,128)}', space=vmem, size = 0x12000, scoped, tag = 'internal scratch']
  %s0 = inlined_call_operand.hbm [shape: f32[16,128], index: 0, kind: input, shape index: {}]
  %s1 = inlined_call_operand.hbm [shape: f32[16,128], index: 1, kind: output, shape index: {}]
  %s2 = sld [smem:[#allocation0]]
  $region18: #{tpu_custom_call.1} parent=0
    _
  %s4 = ssub.s32 1, %s2
  %s5 = scalar_select 0, %s4, %s2
  $region1: #{tpu_custom_call.1} parent=0
    #allocation2 [shape = 'u8[8192]{0}', space=vmem, size = 0x2000, scoped, tag = 'input window, operand 0, single buffered']
    #allocation3 [shape = 's32[1]{0}', space=sflag, size = 0x4, scoped, tag = 'scoped memory for tpu_custom_call.1']
    #allocation4 [shape = 's32[1]{0}', space=sflag, size = 0x4, scoped, tag = 'scoped memory for tpu_custom_call.1']
    #allocation5 [shape = 'u8[8192]{0}', space=vmem, size = 0x2000, scoped, tag = 'output window, operand 0, single buffered']
    %6 = vsyncpa [#allocation3], 0
    %7 = vsyncpa [#allocation4], 0
    // Predicated region
    $region2: #{tpu_custom_call.1} parent=1 // pred_check
      _
    $region3: #{tpu_custom_call.1} parent=1 // pred_check_branch
      %9 = sbr.rel (0) target = $region5
    $region4: #{tpu_custom_call.1} parent=1 // pred_region
      %s11 = ssub.s32 256, 256
      %12 = vsyncadd [#allocation3], %s11
      %s13 = sshll.u32 [#allocation2], 4
      %s14 = int_to_ptr.vmem [resolvable:$true] %s13
      %19 = dma.hbm_to_vmem [thread:$0]  %s0, 256, %s14, [#allocation3], 128, 128, 8
    $region5: #{tpu_custom_call.1} parent=1 // pred_fallthru
      _
    // Predicated region
    $region6: #{tpu_custom_call.1} parent=1 // pred_check
      _
    $region7: #{tpu_custom_call.1} parent=1 // pred_check_branch
      %21 = sbr.rel (0) target = $region9
    $region8: #{tpu_custom_call.1} parent=1 // pred_region
      %22 = dma.done [#allocation3], 256
    $region9: #{tpu_custom_call.1} parent=1 // pred_fallthru
      _
    %v23 = vld [vmem:[#allocation2] sm:$0xff]
    %v24 = vld [vmem:[#allocation2 + $0x8] sm:$0xff]
    %v25 = vsub.f32 0.0, %v23
    %v26 = vsub.f32 0.0, %v24
    %v27 = vmul.f32 %v25, 1.442695
    %v28 = vpow.pop %v27
    %v29 = vmul.f32 %v26, 1.442695
    %v30 = vpow.pop %v29
    %v31 = vadd.f32 %v28, 1.0
    %v32 = vadd.f32 %v30, 1.0
    %v33 = vrcp.pop %v31
    %v34 = vmul.f32 1.0, %v33
    %v35 = vrcp.pop %v32
    %v36 = vmul.f32 1.0, %v35
    %37 = vst [vmem:[#allocation5] sm:$0xff] %v34
    %38 = vst [vmem:[#allocation5 + $0x8] sm:$0xff] %v36
    // Predicated region
    $region10: #{tpu_custom_call.1} parent=1 // pred_check
      _
    $region11: #{tpu_custom_call.1} parent=1 // pred_check_branch
      %40 = sbr.rel (0) target = $region13
    $region12: #{tpu_custom_call.1} parent=1 // pred_region
      %s42 = ssub.s32 256, 256
      %43 = vsyncadd [#allocation4], %s42
      %s44 = sshll.u32 [#allocation5], 4
      %s45 = int_to_ptr.vmem [resolvable:$true] %s44
      %50 = dma.vmem_to_hbm [thread:$0]  %s45, 256, %s1, [#allocation4], 128, 128, 8
    $region13: #{tpu_custom_call.1} parent=1 // pred_fallthru
      _
    // Predicated region
    $region14: #{tpu_custom_call.1} parent=1 // pred_check
      _
    $region15: #{tpu_custom_call.1} parent=1 // pred_check_branch
      %52 = sbr.rel (0) target = $region17
    $region16: #{tpu_custom_call.1} parent=1 // pred_region
      %53 = dma.done [#allocation4], 256
    $region17: #{tpu_custom_call.1} parent=1 // pred_fallthru
      _
    %54 = vsyncpa [#allocation3], 1
    %55 = vsyncpa [#allocation4], 1

</llo_original>
